<compile_context>
chip_gen: v5e
topology: v5e:2x2
jax: 0.10.0
libtpu: 0.0.40
codegen_flags: <defaults>
</compile_context>

<pallas_src>
import numpy as np
import jax
import jax.numpy as jnp
from jax.experimental import pallas as pl
from jax.experimental.pallas import tpu as pltpu


def _round_up(v: int, m: int) -> int:
    return ((v + m - 1) // m) * m


def _pad_sizes(n: int):
    """Padded node count + (row, col) tile sizes.

    n_pad is the tightest 128-multiple (no 512 inflation).  Tiles are divisors of
    n_pad; the row tile prefers >= 2 tiles so both v7x TensorCores get work under
    dimension_semantics=("parallel", ...) (harmless on single-TC v5e/v6e).
    """
    n_pad = _round_up(n, 128)
    row_cands = [t for t in (512, 256, 128) if n_pad % t == 0]
    tm = next((t for t in row_cands if n_pad // t >= 2), row_cands[-1])
    tk = next(t for t in (1024, 512, 256, 128) if n_pad % t == 0)
    return n_pad, tm, tk


def graphconv_relu_kernel(
    counts_ref,   # SMEM (n_row_tiles,)          int32: # non-empty col blocks per row tile
    cols_ref,     # SMEM (n_row_tiles * max_k,)  int32: col-block ids (last id repeated)
    a_ref,        # VMEM (TM, TK)   bf16: adjacency tile A[row_tile, cols[i, k]]
    x_src_ref,    # VMEM (TK, Fp)   bf16: source-node features for that col block
    x_root_ref,   # VMEM (TM, Fp)   f32 : root-node features for this row tile
    w_rel_ref,    # VMEM (Fp, Fop)  f32
    w_root_ref,   # VMEM (Fp, Fop)  f32
    b_ref,        # VMEM (1, Fop)   f32
    o_ref,        # VMEM (TM, Fop)  f32
    acc_ref,      # VMEM (TM, Fp)   f32 scratch: neighbor-aggregation accumulator
):
    i = pl.program_id(0)
    k = pl.program_id(1)

    @pl.when(k == 0)
    def _init():
        acc_ref[...] = jnp.zeros_like(acc_ref)

    # Only the first counts[i] k-steps carry a real (non-empty) adjacency block;
    # past that the index_map repeats the previous block (no new DMA) and we skip.
    @pl.when(k < counts_ref[i])
    def _accumulate():
        acc_ref[...] += jnp.dot(
            a_ref[...], x_src_ref[...], preferred_element_type=jnp.float32
        )

    @pl.when(k == pl.num_programs(1) - 1)
    def _epilogue():
        out = jnp.dot(acc_ref[...], w_rel_ref[...], preferred_element_type=jnp.float32)
        out += jnp.dot(x_root_ref[...], w_root_ref[...], preferred_element_type=jnp.float32)
        out += b_ref[...]                       # (1, Fop) broadcasts over rows
        o_ref[...] = jnp.maximum(out, 0.0).astype(o_ref.dtype)


def pack_adjacency(edge_index, edge_attr, num_nodes, n_pad, tm, tk):
    """Dense padded bf16 adjacency + block-sparse (row-tile -> col-block) metadata.

    Depends only on graph structure: in a multi-layer GNN build this ONCE per graph
    and reuse it across layers / steps (the O(N^2) scatter is not free).
    """
    src = np.asarray(edge_index[0])
    dst = np.asarray(edge_index[1])

    # A[dst, src] += edge_weight, padded, stored in bf16 (accumulation stays f32).
    adj = (
        jnp.zeros((n_pad, n_pad), jnp.float32)
        .at[jnp.asarray(dst), jnp.asarray(src)]
        .add(jnp.asarray(edge_attr, jnp.float32))
        .astype(jnp.bfloat16)
    )

    n_row_tiles = n_pad // tm
    n_col_tiles = n_pad // tk
    nonempty = np.zeros((n_row_tiles, n_col_tiles), dtype=bool)
    nonempty[dst // tm, src // tk] = True
    counts = nonempty.sum(axis=1).astype(np.int32)
    max_k = max(int(counts.max()), 1)

    cols = np.zeros((n_row_tiles, max_k), dtype=np.int32)
    for i in range(n_row_tiles):
        nz = np.nonzero(nonempty[i])[0].astype(np.int32)
        if nz.size == 0:
            nz = np.zeros((1,), dtype=np.int32)  # dummy block; counts[i]==0 skips it
        cols[i, : nz.size] = nz
        cols[i, nz.size:] = nz[-1]               # repeat last -> DMA reuse, compute skipped
    return adj, jnp.asarray(counts), jnp.asarray(cols.reshape(-1)), max_k, int(counts.sum())


def graph_conv_layer(x, edge_index, edge_attr, w_rel, b_rel, w_root):
    """x: (N, F_in) f32; edge_index: (2, E) int32 [src; dst]; edge_attr: (E,) f32.
    w_rel, w_root: (F_in, F_out); b_rel: (F_out,).  Returns (N, F_out) f32."""
    n, f_in = x.shape
    f_out = w_rel.shape[1]

    n_pad, tm, tk = _pad_sizes(n)
    f_in_pad = _round_up(f_in, 128)
    f_out_pad = _round_up(f_out, 128)

    # Graph-structure packing (cacheable across layers; see pack_adjacency).
    adj, counts, cols, max_k, nnz_blocks = pack_adjacency(
        edge_index, edge_attr, n, n_pad, tm, tk
    )

    # Lane-dense (128-padded) operands.  Zero padding is exact for this math.
    x_f32 = jnp.zeros((n_pad, f_in_pad), jnp.float32).at[:n, :f_in].set(x)
    x_bf = x_f32.astype(jnp.bfloat16)            # feeds the bf16 aggregation matmul
    w_rel_p = jnp.zeros((f_in_pad, f_out_pad), jnp.float32).at[:f_in, :f_out].set(w_rel)
    w_root_p = jnp.zeros((f_in_pad, f_out_pad), jnp.float32).at[:f_in, :f_out].set(w_root)
    b_p = jnp.zeros((1, f_out_pad), jnp.float32).at[0, :f_out].set(b_rel)

    n_row_tiles = n_pad // tm
    grid = (n_row_tiles, max_k)

    # Data-dependent index maps: only non-empty adjacency column blocks are fetched.
    a_map = lambda i, k, cnt_ref, col_ref: (i, col_ref[i * max_k + k])
    xsrc_map = lambda i, k, cnt_ref, col_ref: (col_ref[i * max_k + k], 0)

    flops = 2 * nnz_blocks * tm * tk * f_in_pad + 4 * n_pad * f_in_pad * f_out_pad
    bytes_accessed = (
        nnz_blocks * tm * tk * 2                  # bf16 adjacency blocks actually read
        + n_pad * f_in_pad * (2 + 4)              # x: bf16 src view + f32 root view
        + 2 * f_in_pad * f_out_pad * 4 + f_out_pad * 4
        + n_pad * f_out_pad * 4                   # output
    )

    out_padded = pl.pallas_call(
        graphconv_relu_kernel,
        out_shape=jax.ShapeDtypeStruct((n_pad, f_out_pad), jnp.float32),
        grid_spec=pltpu.PrefetchScalarGridSpec(
            num_scalar_prefetch=2,
            grid=grid,
            in_specs=[
                pl.BlockSpec((tm, tk), a_map),                                    # A (bf16)
                pl.BlockSpec((tk, f_in_pad), xsrc_map),                           # x_src (bf16)
                pl.BlockSpec((tm, f_in_pad), lambda i, k, c, s: (i, 0)),          # x_root (f32)
                pl.BlockSpec((f_in_pad, f_out_pad), lambda i, k, c, s: (0, 0)),   # w_rel
                pl.BlockSpec((f_in_pad, f_out_pad), lambda i, k, c, s: (0, 0)),   # w_root
                pl.BlockSpec((1, f_out_pad), lambda i, k, c, s: (0, 0)),          # bias
            ],
            out_specs=pl.BlockSpec((tm, f_out_pad), lambda i, k, c, s: (i, 0)),
            scratch_shapes=[pltpu.VMEM((tm, f_in_pad), jnp.float32)],
        ),
        compiler_params=pltpu.CompilerParams(
            dimension_semantics=("parallel", "arbitrary"),
            # ~48 MiB is safe on v7x (64 MiB physical); v5e/v6e (128 MiB) can go higher
            # with larger tk if F grows.  Current tiles use only a few MiB.
            vmem_limit_bytes=48 * 1024 * 1024,
        ),
        cost_estimate=pl.CostEstimate(
            flops=flops, transcendentals=0, bytes_accessed=bytes_accessed
        ),
        # TODO(synk): after profiling, mark grid-invariant inputs (w_rel/w_root/bias/
        # x_root) with pipeline_mode=pl.Buffered(1) and try Buffered(3) on the A stream
        # if DMA is exposed; left at defaults to keep lowering conservative.
    )(counts, cols, adj, x_bf, x_f32, w_rel_p, w_root_p, b_p)

    return out_padded[:n, :f_out]


if __name__ == "__main__":
    N = 16           # number of nodes
    E = 48           # number of edges
    F_IN = 8         # in_features
    F_OUT = 32       # out_features

    key = jax.random.PRNGKey(0)
    kx, ke_src, ke_dst, kw, kwrel, kwroot, kbrel = jax.random.split(key, 7)

    x = jax.random.normal(kx, (N, F_IN), dtype=jnp.float32)
    edge_src = jax.random.randint(ke_src, (E,), 0, N, dtype=jnp.int32)
    edge_dst = jax.random.randint(ke_dst, (E,), 0, N, dtype=jnp.int32)
    edge_index = jnp.stack([edge_src, edge_dst], axis=0)            # (2, E) [src; dst]
    edge_attr = jax.random.uniform(kw, (E,), dtype=jnp.float32)     # scalar edge weights

    # Deterministic parameters (shapes as in GraphConv(in_features, out_features)).
    w_rel = 0.1 * jax.random.normal(kwrel, (F_IN, F_OUT), dtype=jnp.float32)
    w_root = 0.1 * jax.random.normal(kwroot, (F_IN, F_OUT), dtype=jnp.float32)
    b_rel = 0.1 * jax.random.normal(kbrel, (F_OUT,), dtype=jnp.float32)

    out = graph_conv_layer(x, edge_index, edge_attr, w_rel, b_rel, w_root)
    out = jax.block_until_ready(out)

    # Pure-JAX f32 reference.  The kernel feeds the aggregation matmul with bf16
    # adjacency / source features (f32 accumulation), so use a loosened tolerance.
    adj_ref = jnp.zeros((N, N), jnp.float32).at[edge_index[1], edge_index[0]].add(edge_attr)
    ref = jnp.maximum(adj_ref @ x @ w_rel + x @ w_root + b_rel[None, :], 0.0)
    assert out.shape == (N, F_OUT)
    assert jnp.allclose(out, ref, atol=2e-2, rtol=2e-2), float(jnp.max(jnp.abs(out - ref)))

    print("KERNEL_OK")
</pallas_src>

<mosaic_0001>
module attributes {stable_mosaic.version = 11 : i64} {
  func.func @graphconv_relu_kernel(%arg0: i32, %arg1: i32, %arg2: memref<1xi32, #tpu.memory_space<smem>>, %arg3: memref<1xi32, #tpu.memory_space<smem>>, %arg4: memref<128x128xbf16, #tpu.memory_space<vmem>>, %arg5: memref<128x128xbf16, #tpu.memory_space<vmem>>, %arg6: memref<128x128xf32, #tpu.memory_space<vmem>>, %arg7: memref<128x128xf32, #tpu.memory_space<vmem>>, %arg8: memref<128x128xf32, #tpu.memory_space<vmem>>, %arg9: memref<1x128xf32, #tpu.memory_space<vmem>>, %arg10: memref<128x128xf32, #tpu.memory_space<vmem>>, %arg11: memref<128x128xf32, #tpu.memory_space<vmem>>) attributes {dimension_semantics = [#tpu.dimension_semantics<parallel>, #tpu.dimension_semantics<arbitrary>], iteration_bounds = array<i64: 1, 1>, scalar_prefetch = 2 : i64, scratch_operands = 1 : i64, tpu.core_type = #tpu.core_type<tc>, window_params = [{transform_indices = @transform_0, window_bounds = array<i64: 128, 128>}, {transform_indices = @transform_1, window_bounds = array<i64: 128, 128>}, {transform_indices = @transform_2, window_bounds = array<i64: 128, 128>}, {pipeline_mode = #tpu.pipeline_mode<synchronous>, transform_indices = @transform_3, window_bounds = array<i64: 128, 128>}, {pipeline_mode = #tpu.pipeline_mode<synchronous>, transform_indices = @transform_4, window_bounds = array<i64: 128, 128>}, {pipeline_mode = #tpu.pipeline_mode<synchronous>, transform_indices = @transform_5, window_bounds = array<i64: 1, 128>}, {transform_indices = @transform_6, window_bounds = array<i64: 128, 128>}]} {
    %c0_i32 = arith.constant 0 : i32
    %0 = arith.cmpi eq, %arg1, %c0_i32 : i32
    %1 = arith.extui %0 : i1 to i32
    %c0_i32_0 = arith.constant 0 : i32
    %2 = arith.cmpi ne, %1, %c0_i32_0 : i32
    scf.if %2 {
      %cst = arith.constant 0.000000e+00 : f32
      %11 = vector.broadcast %cst : f32 to vector<128x128xf32>
      %c0 = arith.constant 0 : index
      %c0_4 = arith.constant 0 : index
      %12 = vector.load %arg11[%c0, %c0_4] : memref<128x128xf32, #tpu.memory_space<vmem>>, vector<128x128xf32>
      tpu.vector_store %arg11[%c0, %c0_4], %11 {strides = array<i32>} : memref<128x128xf32, #tpu.memory_space<vmem>>, vector<128x128xf32>,
    } else {
    }
    %3 = arith.index_cast %arg0 : i32 to index
    %4 = memref.load %arg2[%3] : memref<1xi32, #tpu.memory_space<smem>>
    %5 = arith.cmpi slt, %arg1, %4 : i32
    %6 = arith.extui %5 : i1 to i32
    %c0_i32_1 = arith.constant 0 : i32
    %7 = arith.cmpi ne, %6, %c0_i32_1 : i32
    scf.if %7 {
      %c0 = arith.constant 0 : index
      %c0_4 = arith.constant 0 : index
      %11 = vector.load %arg11[%c0, %c0_4] : memref<128x128xf32, #tpu.memory_space<vmem>>, vector<128x128xf32>
      %c0_5 = arith.constant 0 : index
      %c0_6 = arith.constant 0 : index
      %12 = vector.load %arg4[%c0_5, %c0_6] : memref<128x128xbf16, #tpu.memory_space<vmem>>, vector<128x128xbf16>
      %c0_7 = arith.constant 0 : index
      %c0_8 = arith.constant 0 : index
      %13 = vector.load %arg5[%c0_7, %c0_8] : memref<128x128xbf16, #tpu.memory_space<vmem>>, vector<128x128xbf16>
      %cst = arith.constant dense<0.000000e+00> : vector<128x128xf32>
      %14 = tpu.matmul %12, %13, %cst {dimension_numbers = #tpu.dot_dimension_numbers<[1], [0], [0], [1], [0, 0, 1, 1], [], []>} : vector<128x128xbf16>, vector<128x128xbf16>, vector<128x128xf32> -> vector<128x128xf32>
      %15 = arith.addf %11, %14 : vector<128x128xf32>
      %c0_9 = arith.constant 0 : index
      %c0_10 = arith.constant 0 : index
      %16 = vector.load %arg11[%c0_9, %c0_10] : memref<128x128xf32, #tpu.memory_space<vmem>>, vector<128x128xf32>
      tpu.vector_store %arg11[%c0_9, %c0_10], %15 {strides = array<i32>} : memref<128x128xf32, #tpu.memory_space<vmem>>, vector<128x128xf32>,
    } else {
    }
    %c0_i32_2 = arith.constant 0 : i32
    %8 = arith.cmpi eq, %arg1, %c0_i32_2 : i32
    %9 = arith.extui %8 : i1 to i32
    %c0_i32_3 = arith.constant 0 : i32
    %10 = arith.cmpi ne, %9, %c0_i32_3 : i32
    scf.if %10 {
      %c0 = arith.constant 0 : index
      %c0_4 = arith.constant 0 : index
      %11 = vector.load %arg11[%c0, %c0_4] : memref<128x128xf32, #tpu.memory_space<vmem>>, vector<128x128xf32>
      %c0_5 = arith.constant 0 : index
      %c0_6 = arith.constant 0 : index
      %12 = vector.load %arg7[%c0_5, %c0_6] : memref<128x128xf32, #tpu.memory_space<vmem>>, vector<128x128xf32>
      %cst = arith.constant dense<0.000000e+00> : vector<128x128xf32>
      %13 = tpu.matmul %11, %12, %cst {dimension_numbers = #tpu.dot_dimension_numbers<[1], [0], [0], [1], [0, 0, 1, 1], [], []>} : vector<128x128xf32>, vector<128x128xf32>, vector<128x128xf32> -> vector<128x128xf32>
      %c0_7 = arith.constant 0 : index
      %c0_8 = arith.constant 0 : index
      %14 = vector.load %arg6[%c0_7, %c0_8] : memref<128x128xf32, #tpu.memory_space<vmem>>, vector<128x128xf32>
      %c0_9 = arith.constant 0 : index
      %c0_10 = arith.constant 0 : index
      %15 = vector.load %arg8[%c0_9, %c0_10] : memref<128x128xf32, #tpu.memory_space<vmem>>, vector<128x128xf32>
      %cst_11 = arith.constant dense<0.000000e+00> : vector<128x128xf32>
      %16 = tpu.matmul %14, %15, %cst_11 {dimension_numbers = #tpu.dot_dimension_numbers<[1], [0], [0], [1], [0, 0, 1, 1], [], []>} : vector<128x128xf32>, vector<128x128xf32>, vector<128x128xf32> -> vector<128x128xf32>
      %17 = arith.addf %13, %16 : vector<128x128xf32>
      %c0_12 = arith.constant 0 : index
      %c0_13 = arith.constant 0 : index
      %18 = vector.load %arg9[%c0_12, %c0_13] : memref<1x128xf32, #tpu.memory_space<vmem>>, vector<1x128xf32>
      %19 = vector.broadcast %18 : vector<1x128xf32> to vector<128x128xf32>
      %20 = arith.addf %17, %19 : vector<128x128xf32>
      %cst_14 = arith.constant 0.000000e+00 : f32
      %21 = vector.broadcast %cst_14 : f32 to vector<128x128xf32>
      %22 = arith.maximumf %20, %21 : vector<128x128xf32>
      %c0_15 = arith.constant 0 : index
      %c0_16 = arith.constant 0 : index
      %23 = vector.load %arg10[%c0_15, %c0_16] : memref<128x128xf32, #tpu.memory_space<vmem>>, vector<128x128xf32>
      tpu.vector_store %arg10[%c0_15, %c0_16], %22 {strides = array<i32>} : memref<128x128xf32, #tpu.memory_space<vmem>>, vector<128x128xf32>,
    } else {
    }
    return
  }
  func.func @transform_0(%arg0: i32, %arg1: i32, %arg2: memref<1xi32, #tpu.memory_space<smem>>, %arg3: memref<1xi32, #tpu.memory_space<smem>>) -> (i32, i32) {
    %c1_i32 = arith.constant 1 : i32
    %0 = arith.muli %arg0, %c1_i32 : i32
    %1 = arith.addi %0, %arg1 : i32
    %2 = arith.index_cast %1 : i32 to index
    %3 = memref.load %arg3[%2] : memref<1xi32, #tpu.memory_space<smem>>
    %c0_i32 = arith.constant 0 : i32
    return %arg0, %3 : i32, i32
  }
  func.func @transform_1(%arg0: i32, %arg1: i32, %arg2: memref<1xi32, #tpu.memory_space<smem>>, %arg3: memref<1xi32, #tpu.memory_space<smem>>) -> (i32, i32) {
    %c1_i32 = arith.constant 1 : i32
    %0 = arith.muli %arg0, %c1_i32 : i32
    %1 = arith.addi %0, %arg1 : i32
    %2 = arith.index_cast %1 : i32 to index
    %3 = memref.load %arg3[%2] : memref<1xi32, #tpu.memory_space<smem>>
    %c0_i32 = arith.constant 0 : i32
    %c0_i32_0 = arith.constant 0 : i32
    return %3, %c0_i32 : i32, i32
  }
  func.func @transform_2(%arg0: i32, %arg1: i32, %arg2: memref<1xi32, #tpu.memory_space<smem>>, %arg3: memref<1xi32, #tpu.memory_space<smem>>) -> (i32, i32) {
    %c0_i32 = arith.constant 0 : i32
    %c0_i32_0 = arith.constant 0 : i32
    return %arg0, %c0_i32 : i32, i32
  }
  func.func @transform_3(%arg0: i32, %arg1: i32, %arg2: memref<1xi32, #tpu.memory_space<smem>>, %arg3: memref<1xi32, #tpu.memory_space<smem>>) -> (i32, i32) {
    %c0_i32 = arith.constant 0 : i32
    %c0_i32_0 = arith.constant 0 : i32
    %c0_i32_1 = arith.constant 0 : i32
    return %c0_i32, %c0_i32_0 : i32, i32
  }
  func.func @transform_4(%arg0: i32, %arg1: i32, %arg2: memref<1xi32, #tpu.memory_space<smem>>, %arg3: memref<1xi32, #tpu.memory_space<smem>>) -> (i32, i32) {
    %c0_i32 = arith.constant 0 : i32
    %c0_i32_0 = arith.constant 0 : i32
    %c0_i32_1 = arith.constant 0 : i32
    return %c0_i32, %c0_i32_0 : i32, i32
  }
  func.func @transform_5(%arg0: i32, %arg1: i32, %arg2: memref<1xi32, #tpu.memory_space<smem>>, %arg3: memref<1xi32, #tpu.memory_space<smem>>) -> (i32, i32) {
    %c0_i32 = arith.constant 0 : i32
    %c0_i32_0 = arith.constant 0 : i32
    %c0_i32_1 = arith.constant 0 : i32
    return %c0_i32, %c0_i32_0 : i32, i32
  }
  func.func @transform_6(%arg0: i32, %arg1: i32, %arg2: memref<1xi32, #tpu.memory_space<smem>>, %arg3: memref<1xi32, #tpu.memory_space<smem>>) -> (i32, i32) {
    %c0_i32 = arith.constant 0 : i32
    %c0_i32_0 = arith.constant 0 : i32
    return %arg0, %c0_i32 : i32, i32
  }
}

</mosaic_0001>

<llo_original>
// kernel: tpu_custom_call.1
$region0: #{tpu_custom_call.1}
  #allocation0 [shape = 'u32[]', space=smem, size = 0x4, offset = 0x4, fixed_abs, tag = 'smem constant byte address 0x4 - core index']
  #allocation1 [shape = 'u32[72,128]{1,0:T(1,128)}', space=vmem, size = 0x9000, scoped, tag = 'internal scratch']
  #allocation2 [shape = 'f32[128,128]{1,0:T(8,128)}', space=vmem, size = 0x10000, scoped, tag = 'scratch operand']
  #allocation3 [shape = 's32[1]{0}', space=sflag, size = 0x4, scoped, tag = 'scoped memory for tpu_custom_call.1']
  #allocation4 [shape = 's32[1]{0:T(128)S(6)}', space=smem, size = 0x200, scoped, tag = 'prefetched SMEM operand 0']
  #allocation5 [shape = 's32[1]{0:T(128)S(6)}', space=smem, size = 0x200, scoped, tag = 'prefetched SMEM operand 1']
  %s0 = inlined_call_operand.<no memory space> [shape: s32[1], index: 0, kind: input, shape index: {}]
  %s1 = inlined_call_operand.<no memory space> [shape: s32[1], index: 1, kind: input, shape index: {}]
  %s2 = inlined_call_operand.hbm [shape: bf16[128,128], index: 2, kind: input, shape index: {}]
  %s3 = inlined_call_operand.hbm [shape: bf16[128,128], index: 3, kind: input, shape index: {}]
  %s4 = inlined_call_operand.hbm [shape: f32[128,128], index: 4, kind: input, shape index: {}]
  %s5 = inlined_call_operand.hbm [shape: f32[128,128], index: 5, kind: input, shape index: {}]
  %s6 = inlined_call_operand.hbm [shape: f32[128,128], index: 6, kind: input, shape index: {}]
  %s7 = inlined_call_operand.vmem [shape: f32[1,128], index: 7, kind: input, shape index: {}]
  %s8 = inlined_call_operand.hbm [shape: f32[128,128], index: 8, kind: output, shape index: {}]
  %s9 = sld [smem:[#allocation0]]
  $region66: #{tpu_custom_call.1} parent=0
    _
  %s11 = ssub.s32 1, %s9
  %s12 = scalar_select 0, %s11, %s9
  %13 = sst [smem:[#allocation4]] %s0
  %14 = sst [smem:[#allocation5]] %s1
  $region1: #{tpu_custom_call.1} parent=0
    #allocation6 [shape = 'u8[32768]{0}', space=vmem, size = 0x8000, scoped, tag = 'input window, operand 2, single buffered']
    #allocation7 [shape = 's32[1]{0}', space=sflag, size = 0x4, scoped, tag = 'scoped memory for tpu_custom_call.1']
    #allocation8 [shape = 's32[1]{0}', space=sflag, size = 0x4, scoped, tag = 'scoped memory for tpu_custom_call.1']
    #allocation9 [shape = 'u8[32768]{0}', space=vmem, size = 0x8000, scoped, tag = 'input window, operand 3, single buffered']
    #allocation10 [shape = 's32[1]{0}', space=sflag, size = 0x4, scoped, tag = 'scoped memory for tpu_custom_call.1']
    #allocation11 [shape = 'u8[65536]{0}', space=vmem, size = 0x10000, scoped, tag = 'input window, operand 4, single buffered']
    #allocation12 [shape = 'u8[65536]{0}', space=vmem, size = 0x10000, scoped, tag = 'input window, operand 5, single buffered']
    #allocation13 [shape = 's32[1]{0}', space=sflag, size = 0x4, scoped, tag = 'scoped memory for tpu_custom_call.1']
    #allocation14 [shape = 'u8[65536]{0}', space=vmem, size = 0x10000, scoped, tag = 'input window, operand 6, single buffered']
    #allocation15 [shape = 'u8[65536]{0}', space=vmem, size = 0x10000, scoped, tag = 'output window, operand 0, single buffered']
    %15 = vsyncpa [#allocation7], 0
    %16 = vsyncpa [#allocation10], 0
    %17 = vsyncpa [#allocation13], 0
    %18 = vsyncpa [#allocation8], 0
    // Predicated region
    $region2: #{tpu_custom_call.1} parent=1 // pred_check
      _
    $region3: #{tpu_custom_call.1} parent=1 // pred_check_branch
      %20 = sbr.rel (0) target = $region5
    $region4: #{tpu_custom_call.1} parent=1 // pred_region
      %s21 = sadd.s32 0, 0
      %s22 = sld [smem:[#allocation5 + %s21]]
      %24 = vsyncadd [#allocation7], 0
      %s25 = smul.addr %s22, 4
      %s26 = scalar_lea.hbm %s2, %s25
      %s27 = sshll.u32 %s26, 4
      %s28 = int_to_ptr.hbm [resolvable:$true] %s27
      %s29 = sshll.u32 [#allocation6], 4
      %s30 = int_to_ptr.vmem [resolvable:$true] %s29
      %35 = dma.hbm_to_vmem [thread:$0]  %s28, 1024, %s30, [#allocation7], 64, 64, 4
    $region5: #{tpu_custom_call.1} parent=1 // pred_fallthru
      _
    // Predicated region
    $region6: #{tpu_custom_call.1} parent=1 // pred_check
      _
    $region7: #{tpu_custom_call.1} parent=1 // pred_check_branch
      %37 = sbr.rel (0) target = $region9
    $region8: #{tpu_custom_call.1} parent=1 // pred_region
      %s38 = sadd.s32 0, 0
      %s39 = sld [smem:[#allocation5 + %s38]]
      %s40 = smul.u32 16, %s39
      %42 = vsyncadd [#allocation10], 0
      %s43 = smul.addr %s40, 4
      %s44 = scalar_lea.hbm %s3, %s43
      %s45 = sshll.u32 %s44, 4
      %s46 = int_to_ptr.hbm [resolvable:$true] %s45
      %s47 = sshll.u32 [#allocation9], 4
      %s48 = int_to_ptr.vmem [resolvable:$true] %s47
      %53 = dma.hbm_to_vmem [thread:$0]  %s46, 1024, %s48, [#allocation10], 64, 64, 4
    $region9: #{tpu_custom_call.1} parent=1 // pred_fallthru
      _
    // Predicated region
    $region10: #{tpu_custom_call.1} parent=1 // pred_check
      _
    $region11: #{tpu_custom_call.1} parent=1 // pred_check_branch
      %55 = sbr.rel (0) target = $region13
    $region12: #{tpu_custom_call.1} parent=1 // pred_region
      %57 = vsyncadd [#allocation10], 0
      %s58 = sshll.u32 %s4, 4
      %s59 = int_to_ptr.hbm [resolvable:$true] %s58
      %s60 = sshll.u32 [#allocation11], 4
      %s61 = int_to_ptr.vmem [resolvable:$true] %s60
      %66 = dma.hbm_to_vmem [thread:$0]  %s59, 2048, %s61, [#allocation10], 128, 128, 8
    $region13: #{tpu_custom_call.1} parent=1 // pred_fallthru
      _
    // Predicated region
    $region14: #{tpu_custom_call.1} parent=1 // pred_check
      _
    $region15: #{tpu_custom_call.1} parent=1 // pred_check_branch
      %68 = sbr.rel (0) target = $region17
    $region16: #{tpu_custom_call.1} parent=1 // pred_region
      %70 = vsyncadd [#allocation13], 0
      %s71 = sshll.u32 %s5, 4
      %s72 = int_to_ptr.hbm [resolvable:$true] %s71
      %s73 = sshll.u32 [#allocation12], 4
      %s74 = int_to_ptr.vmem [resolvable:$true] %s73
      %79 = dma.hbm_to_vmem [thread:$0]  %s72, 2048, %s74, [#allocation13], 128, 128, 8
    $region17: #{tpu_custom_call.1} parent=1 // pred_fallthru
      _
    // Predicated region
    $region18: #{tpu_custom_call.1} parent=1 // pred_check
      _
    $region19: #{tpu_custom_call.1} parent=1 // pred_check_branch
      %81 = sbr.rel (0) target = $region21
    $region20: #{tpu_custom_call.1} parent=1 // pred_region
      %83 = vsyncadd [#allocation13], 0
      %s84 = sshll.u32 %s6, 4
      %s85 = int_to_ptr.hbm [resolvable:$true] %s84
      %s86 = sshll.u32 [#allocation14], 4
      %s87 = int_to_ptr.vmem [resolvable:$true] %s86
      %92 = dma.hbm_to_vmem [thread:$0]  %s85, 2048, %s87, [#allocation13], 128, 128, 8
    $region21: #{tpu_custom_call.1} parent=1 // pred_fallthru
      _
    // Predicated region
    $region22: #{tpu_custom_call.1} parent=1 // pred_check
      _
    $region23: #{tpu_custom_call.1} parent=1 // pred_check_branch
      %94 = sbr.rel (0) target = $region25
    $region24: #{tpu_custom_call.1} parent=1 // pred_region
      _
    $region25: #{tpu_custom_call.1} parent=1 // pred_fallthru
      _
    // Predicated region
    $region26: #{tpu_custom_call.1} parent=1 // pred_check
      _
    $region27: #{tpu_custom_call.1} parent=1 // pred_check_branch
      %96 = sbr.rel (0) target = $region29
    $region28: #{tpu_custom_call.1} parent=1 // pred_region
      %98 = dma.done [#allocation7], 1024
    $region29: #{tpu_custom_call.1} parent=1 // pred_fallthru
      _
    // Predicated region
    $region30: #{tpu_custom_call.1} parent=1 // pred_check
      _
    $region31: #{tpu_custom_call.1} parent=1 // pred_check_branch
      %100 = sbr.rel (0) target = $region33
    $region32: #{tpu_custom_call.1} parent=1 // pred_region
      %102 = dma.done [#allocation10], 1024
    $region33: #{tpu_custom_call.1} parent=1 // pred_fallthru
      _
    // Predicated region
    $region34: #{tpu_custom_call.1} parent=1 // pred_check
      _
    $region35: #{tpu_custom_call.1} parent=1 // pred_check_branch
      %104 = sbr.rel (0) target = $region37
    $region36: #{tpu_custom_call.1} parent=1 // pred_region
      %106 = dma.done [#allocation10], 2048
    $region37: #{tpu_custom_call.1} parent=1 // pred_fallthru
      _
    // Predicated region
    $region38: #{tpu_custom_call.1} parent=1 // pred_check
      _
    $region39: #{tpu_custom_call.1} parent=1 // pred_check_branch
      %108 = sbr.rel (0) target = $region41
    $region40: #{tpu_custom_call.1} parent=1 // pred_region
      %110 = dma.done [#allocation13], 2048
    $region41: #{tpu_custom_call.1} parent=1 // pred_fallthru
      _
    // Predicated region
    $region42: #{tpu_custom_call.1} parent=1 // pred_check
      _
    $region43: #{tpu_custom_call.1} parent=1 // pred_check_branch
      %112 = sbr.rel (0) target = $region45
    $region44: #{tpu_custom_call.1} parent=1 // pred_region
      %114 = dma.done [#allocation13], 2048
    $region45: #{tpu_custom_call.1} parent=1 // pred_fallthru
      _
    %s115 = sadd.s32 0, 0
    %s116 = sld [smem:[#allocation5 + %s115]]
    %s117 = sadd.s32 0, 0
    %s118 = sld [smem:[#allocation5 + %s117]]
    %s119 = smul.u32 16, %s118
    %p120 = scmp.eq.s32.totalorder 0, 0
    // Predicated region
    $region46: #{tpu_custom_call.1} parent=1 // pred_check
      %p121 = pneg %p120
    $region47: #{tpu_custom_call.1} parent=1 // pred_check_branch
      %123 = sbr.rel (%p121) target = $region49
    $region48: #{tpu_custom_call.1} parent=1 // pred_region
      %124 = vst [vmem:[#allocation2] sm:$0xff] 0.0
      %125 = vst [vmem:[#allocation2 + $0x8] sm:$0xff] 0.0
      %126 = vst [vmem:[#allocation2 + $0x10] sm:$0xff] 0.0
      %127 = vst [vmem:[#allocation2 + $0x18] sm:$0xff] 0.0
      %128 = vst [vmem:[#allocation2 + $0x20] sm:$0xff] 0.0
      %129 = vst [vmem:[#allocation2 + $0x28] sm:$0xff] 0.0
      %130 = vst [vmem:[#allocation2 + $0x30] sm:$0xff] 0.0
      %131 = vst [vmem:[#allocation2 + $0x38] sm:$0xff] 0.0
      %132 = vst [vmem:[#allocation2 + $0x40] sm:$0xff] 0.0
      %133 = vst [vmem:[#allocation2 + $0x48] sm:$0xff] 0.0
      %134 = vst [vmem:[#allocation2 + $0x50] sm:$0xff] 0.0
      %135 = vst [vmem:[#allocation2 + $0x58] sm:$0xff] 0.0
      %136 = vst [vmem:[#allocation2 + $0x60] sm:$0xff] 0.0
      %137 = vst [vmem:[#allocation2 + $0x68] sm:$0xff] 0.0
      %138 = vst [vmem:[#allocation2 + $0x70] sm:$0xff] 0.0
      %139 = vst [vmem:[#allocation2 + $0x78] sm:$0xff] 0.0
    $region49: #{tpu_custom_call.1} parent=1 // pred_fallthru
      _
    %s140 = sld [smem:[#allocation4]]
    %p141 = scmp.lt.s32.totalorder 0, %s140
    // Predicated region
    $region50: #{tpu_custom_call.1} parent=1 // pred_check
      %p142 = pneg %p141
    $region51: #{tpu_custom_call.1} parent=1 // pred_check_branch
      %144 = sbr.rel (%p142) target = $region53
    $region52: #{tpu_custom_call.1} parent=1 // pred_region
      %v145 = vld [vmem:[#allocation2] sm:$0xff]
      %v146 = vld [vmem:[#allocation2 + $0x8] sm:$0xff]
      %v147 = vld [vmem:[#allocation2 + $0x10] sm:$0xff]
      %v148 = vld [vmem:[#allocation2 + $0x18] sm:$0xff]
      %v149 = vld [vmem:[#allocation2 + $0x20] sm:$0xff]
      %v150 = vld [vmem:[#allocation2 + $0x28] sm:$0xff]
      %v151 = vld [vmem:[#allocation2 + $0x30] sm:$0xff]
      %v152 = vld [vmem:[#allocation2 + $0x38] sm:$0xff]
      %v153 = vld [vmem:[#allocation2 + $0x40] sm:$0xff]
      %v154 = vld [vmem:[#allocation2 + $0x48] sm:$0xff]
      %v155 = vld [vmem:[#allocation2 + $0x50] sm:$0xff]
      %v156 = vld [vmem:[#allocation2 + $0x58] sm:$0xff]
      %v157 = vld [vmem:[#allocation2 + $0x60] sm:$0xff]
      %v158 = vld [vmem:[#allocation2 + $0x68] sm:$0xff]
      %v159 = vld [vmem:[#allocation2 + $0x70] sm:$0xff]
      %v160 = vld [vmem:[#allocation2 + $0x78] sm:$0xff]
      %v161 = vld [vmem:[#allocation6] sm:$0xf]
      %v162 = vld [vmem:[#allocation6 + $0x4] sm:$0xf]
      %v163 = vld [vmem:[#allocation6 + $0x8] sm:$0xf]
      %v164 = vld [vmem:[#allocation6 + $0xc] sm:$0xf]
      %v165 = vld [vmem:[#allocation6 + $0x10] sm:$0xf]
      %v166 = vld [vmem:[#allocation6 + $0x14] sm:$0xf]
      %v167 = vld [vmem:[#allocation6 + $0x18] sm:$0xf]
      %v168 = vld [vmem:[#allocation6 + $0x1c] sm:$0xf]
      %v169 = vld [vmem:[#allocation6 + $0x20] sm:$0xf]
      %v170 = vld [vmem:[#allocation6 + $0x24] sm:$0xf]
      %v171 = vld [vmem:[#allocation6 + $0x28] sm:$0xf]
      %v172 = vld [vmem:[#allocation6 + $0x2c] sm:$0xf]
      %v173 = vld [vmem:[#allocation6 + $0x30] sm:$0xf]
      %v174 = vld [vmem:[#allocation6 + $0x34] sm:$0xf]
      %v175 = vld [vmem:[#allocation6 + $0x38] sm:$0xf]
      %v176 = vld [vmem:[#allocation6 + $0x3c] sm:$0xf]
      %v177 = vld [vmem:[#allocation9] sm:$0xf]
      %v178 = vld [vmem:[#allocation9 + $0x4] sm:$0xf]
      %v179 = vld [vmem:[#allocation9 + $0x8] sm:$0xf]
      %v180 = vld [vmem:[#allocation9 + $0xc] sm:$0xf]
      %v181 = vld [vmem:[#allocation9 + $0x10] sm:$0xf]
      %v182 = vld [vmem:[#allocation9 + $0x14] sm:$0xf]
      %v183 = vld [vmem:[#allocation9 + $0x18] sm:$0xf]
      %v184 = vld [vmem:[#allocation9 + $0x1c] sm:$0xf]
      %v185 = vld [vmem:[#allocation9 + $0x20] sm:$0xf]
      %v186 = vld [vmem:[#allocation9 + $0x24] sm:$0xf]
      %v187 = vld [vmem:[#allocation9 + $0x28] sm:$0xf]
      %v188 = vld [vmem:[#allocation9 + $0x2c] sm:$0xf]
      %v189 = vld [vmem:[#allocation9 + $0x30] sm:$0xf]
      %v190 = vld [vmem:[#allocation9 + $0x34] sm:$0xf]
      %v191 = vld [vmem:[#allocation9 + $0x38] sm:$0xf]
      %v192 = vld [vmem:[#allocation9 + $0x3c] sm:$0xf]
      %v209 = vunpack.c.l.b16 %v161
      %v210 = vunpack.c.l.b16 %v162
      %v211 = vunpack.c.l.b16 %v163
      %v212 = vunpack.c.l.b16 %v164
      %v213 = vunpack.c.l.b16 %v165
      %v214 = vunpack.c.l.b16 %v166
      %v215 = vunpack.c.l.b16 %v167
      %v216 = vunpack.c.l.b16 %v168
      %v217 = vunpack.c.l.b16 %v169
      %v218 = vunpack.c.l.b16 %v170
      %v219 = vunpack.c.l.b16 %v171
      %v220 = vunpack.c.l.b16 %v172
      %v221 = vunpack.c.l.b16 %v173
      %v222 = vunpack.c.l.b16 %v174
      %v223 = vunpack.c.l.b16 %v175
      %v224 = vunpack.c.l.b16 %v176
      %v225 = vpack.c.b16 %v210, %v209
      %v226 = vpack.c.b16 %v212, %v211
      %v227 = vpack.c.b16 %v214, %v213
      %v228 = vpack.c.b16 %v216, %v215
      %v229 = vpack.c.b16 %v218, %v217
      %v230 = vpack.c.b16 %v220, %v219
      %v231 = vpack.c.b16 %v222, %v221
      %v232 = vpack.c.b16 %v224, %v223
      %v257 = vunpack.c.l.b16 %v177
      %v258 = vunpack.c.l.b16 %v178
      %v259 = vunpack.c.l.b16 %v179
      %v260 = vunpack.c.l.b16 %v180
      %v261 = vunpack.c.l.b16 %v181
      %v262 = vunpack.c.l.b16 %v182
      %v263 = vunpack.c.l.b16 %v183
      %v264 = vunpack.c.l.b16 %v184
      %v265 = vunpack.c.l.b16 %v185
      %v266 = vunpack.c.l.b16 %v186
      %v267 = vunpack.c.l.b16 %v187
      %v268 = vunpack.c.l.b16 %v188
      %v269 = vunpack.c.l.b16 %v189
      %v270 = vunpack.c.l.b16 %v190
      %v271 = vunpack.c.l.b16 %v191
      %v272 = vunpack.c.l.b16 %v192
      %v273 = vpack.c.b16 %v258, %v257
      %v274 = vpack.c.b16 %v260, %v259
      %v275 = vpack.c.b16 %v262, %v261
      %v276 = vpack.c.b16 %v264, %v263
      %v277 = vpack.c.b16 %v266, %v265
      %v278 = vpack.c.b16 %v268, %v267
      %v279 = vpack.c.b16 %v270, %v269
      %v280 = vpack.c.b16 %v272, %v271
      %289 = vmatpush.bf16.msra.mxu0 %v280
      %290 = vmatpush.bf16.msra.mxu0 %v279
      %291 = vmatpush.bf16.msra.mxu0 %v278
      %292 = vmatpush.bf16.msra.mxu0 %v277
      %293 = vmatpush.bf16.msra.mxu0 %v276
      %294 = vmatpush.bf16.msra.mxu0 %v275
      %295 = vmatpush.bf16.msra.mxu0 %v274
      %296 = vmatpush.bf16.msra.mxu0 %v273
      %297 = vmatmul.bf16.gmra.mxu0 %v225
      %v298 = vpop.f32.mrf.mxu0
      %v299 = vadd.f32 0.0, %v298
      %v300 = vpop.f32.mrf.mxu0
      %v301 = vadd.f32 0.0, %v300
      %302 = vmatmul.bf16.gmra.mxu0 %v226
      %v303 = vpop.f32.mrf.mxu0
      %v304 = vadd.f32 0.0, %v303
      %v305 = vpop.f32.mrf.mxu0
      %v306 = vadd.f32 0.0, %v305
      %307 = vmatmul.bf16.gmra.mxu0 %v227
      %v308 = vpop.f32.mrf.mxu0
      %v309 = vadd.f32 0.0, %v308
      %v310 = vpop.f32.mrf.mxu0
      %v311 = vadd.f32 0.0, %v310
      %312 = vmatmul.bf16.gmra.mxu0 %v228
      %v313 = vpop.f32.mrf.mxu0
      %v314 = vadd.f32 0.0, %v313
      %v315 = vpop.f32.mrf.mxu0
      %v316 = vadd.f32 0.0, %v315
      %317 = vmatmul.bf16.gmra.mxu0 %v229
      %v318 = vpop.f32.mrf.mxu0
      %v319 = vadd.f32 0.0, %v318
      %v320 = vpop.f32.mrf.mxu0
      %v321 = vadd.f32 0.0, %v320
      %322 = vmatmul.bf16.gmra.mxu0 %v230
      %v323 = vpop.f32.mrf.mxu0
      %v324 = vadd.f32 0.0, %v323
      %v325 = vpop.f32.mrf.mxu0
      %v326 = vadd.f32 0.0, %v325
      %327 = vmatmul.bf16.gmra.mxu0 %v231
      %v328 = vpop.f32.mrf.mxu0
      %v329 = vadd.f32 0.0, %v328
      %v330 = vpop.f32.mrf.mxu0
      %v331 = vadd.f32 0.0, %v330
      %332 = vmatmul.bf16.gmra.mxu0 %v232
      %v333 = vpop.f32.mrf.mxu0
      %v334 = vadd.f32 0.0, %v333
      %v335 = vpop.f32.mrf.mxu0
      %v336 = vadd.f32 0.0, %v335
      %337 = vdwg.mxu0
      %v338 = vadd.f32 %v145, %v299
      %v339 = vadd.f32 %v146, %v301
      %v340 = vadd.f32 %v147, %v304
      %v341 = vadd.f32 %v148, %v306
      %v342 = vadd.f32 %v149, %v309
      %v343 = vadd.f32 %v150, %v311
      %v344 = vadd.f32 %v151, %v314
      %v345 = vadd.f32 %v152, %v316
      %v346 = vadd.f32 %v153, %v319
      %v347 = vadd.f32 %v154, %v321
      %v348 = vadd.f32 %v155, %v324
      %v349 = vadd.f32 %v156, %v326
      %v350 = vadd.f32 %v157, %v329
      %v351 = vadd.f32 %v158, %v331
      %v352 = vadd.f32 %v159, %v334
      %v353 = vadd.f32 %v160, %v336
      %354 = vst [vmem:[#allocation2] sm:$0xff] %v338
      %355 = vst [vmem:[#allocation2 + $0x8] sm:$0xff] %v339
      %356 = vst [vmem:[#allocation2 + $0x10] sm:$0xff] %v340
      %357 = vst [vmem:[#allocation2 + $0x18] sm:$0xff] %v341
      %358 = vst [vmem:[#allocation2 + $0x20] sm:$0xff] %v342
      %359 = vst [vmem:[#allocation2 + $0x28] sm:$0xff] %v343
      %360 = vst [vmem:[#allocation2 + $0x30] sm:$0xff] %v344
      %361 = vst [vmem:[#allocation2 + $0x38] sm:$0xff] %v345
      %362 = vst [vmem:[#allocation2 + $0x40] sm:$0xff] %v346
      %363 = vst [vmem:[#allocation2 + $0x48] sm:$0xff] %v347
      %364 = vst [vmem:[#allocation2 + $0x50] sm:$0xff] %v348
      %365 = vst [vmem:[#allocation2 + $0x58] sm:$0xff] %v349
      %366 = vst [vmem:[#allocation2 + $0x60] sm:$0xff] %v350
      %367 = vst [vmem:[#allocation2 + $0x68] sm:$0xff] %v351
      %368 = vst [vmem:[#allocation2 + $0x70] sm:$0xff] %v352
      %369 = vst [vmem:[#allocation2 + $0x78] sm:$0xff] %v353
    $region53: #{tpu_custom_call.1} parent=1 // pred_fallthru
      _
    // Predicated region
    $region54: #{tpu_custom_call.1} parent=1 // pred_check
      %p370 = pneg %p120
    $region55: #{tpu_custom_call.1} parent=1 // pred_check_branch
      %372 = sbr.rel (%p370) target = $region57
    $region56: #{tpu_custom_call.1} parent=1 // pred_region
      %v373 = vld [vmem:[#allocation2] sm:$0xff]
      %v374 = vld [vmem:[#allocation2 + $0x8] sm:$0xff]
      %v375 = vld [vmem:[#allocation2 + $0x10] sm:$0xff]
      %v376 = vld [vmem:[#allocation2 + $0x18] sm:$0xff]
      %v377 = vld [vmem:[#allocation2 + $0x20] sm:$0xff]
      %v378 = vld [vmem:[#allocation2 + $0x28] sm:$0xff]
      %v379 = vld [vmem:[#allocation2 + $0x30] sm:$0xff]
      %v380 = vld [vmem:[#allocation2 + $0x38] sm:$0xff]
      %v381 = vld [vmem:[#allocation2 + $0x40] sm:$0xff]
      %v382 = vld [vmem:[#allocation2 + $0x48] sm:$0xff]
      %v383 = vld [vmem:[#allocation2 + $0x50] sm:$0xff]
      %v384 = vld [vmem:[#allocation2 + $0x58] sm:$0xff]
      %v385 = vld [vmem:[#allocation2 + $0x60] sm:$0xff]
      %v386 = vld [vmem:[#allocation2 + $0x68] sm:$0xff]
      %v387 = vld [vmem:[#allocation2 + $0x70] sm:$0xff]
      %v388 = vld [vmem:[#allocation2 + $0x78] sm:$0xff]
      %v389 = vld [vmem:[#allocation12] sm:$0xff]
      %v390 = vld [vmem:[#allocation12 + $0x8] sm:$0xff]
      %v391 = vld [vmem:[#allocation12 + $0x10] sm:$0xff]
      %v392 = vld [vmem:[#allocation12 + $0x18] sm:$0xff]
      %v393 = vld [vmem:[#allocation12 + $0x20] sm:$0xff]
      %v394 = vld [vmem:[#allocation12 + $0x28] sm:$0xff]
      %v395 = vld [vmem:[#allocation12 + $0x30] sm:$0xff]
      %v396 = vld [vmem:[#allocation12 + $0x38] sm:$0xff]
      %v397 = vld [vmem:[#allocation12 + $0x40] sm:$0xff]
      %v398 = vld [vmem:[#allocation12 + $0x48] sm:$0xff]
      %v399 = vld [vmem:[#allocation12 + $0x50] sm:$0xff]
      %v400 = vld [vmem:[#allocation12 + $0x58] sm:$0xff]
      %v401 = vld [vmem:[#allocation12 + $0x60] sm:$0xff]
      %v402 = vld [vmem:[#allocation12 + $0x68] sm:$0xff]
      %v403 = vld [vmem:[#allocation12 + $0x70] sm:$0xff]
      %v404 = vld [vmem:[#allocation12 + $0x78] sm:$0xff]
      %v405 = vld [vmem:[#allocation11] sm:$0xff]
      %v406 = vld [vmem:[#allocation11 + $0x8] sm:$0xff]
      %v407 = vld [vmem:[#allocation11 + $0x10] sm:$0xff]
      %v408 = vld [vmem:[#allocation11 + $0x18] sm:$0xff]
      %v409 = vld [vmem:[#allocation11 + $0x20] sm:$0xff]
      %v410 = vld [vmem:[#allocation11 + $0x28] sm:$0xff]
      %v411 = vld [vmem:[#allocation11 + $0x30] sm:$0xff]
      %v412 = vld [vmem:[#allocation11 + $0x38] sm:$0xff]
      %v413 = vld [vmem:[#allocation11 + $0x40] sm:$0xff]
      %v414 = vld [vmem:[#allocation11 + $0x48] sm:$0xff]
      %v415 = vld [vmem:[#allocation11 + $0x50] sm:$0xff]
      %v416 = vld [vmem:[#allocation11 + $0x58] sm:$0xff]
      %v417 = vld [vmem:[#allocation11 + $0x60] sm:$0xff]
      %v418 = vld [vmem:[#allocation11 + $0x68] sm:$0xff]
      %v419 = vld [vmem:[#allocation11 + $0x70] sm:$0xff]
      %v420 = vld [vmem:[#allocation11 + $0x78] sm:$0xff]
      %v421 = vld [vmem:[#allocation14] sm:$0xff]
      %v422 = vld [vmem:[#allocation14 + $0x8] sm:$0xff]
      %v423 = vld [vmem:[#allocation14 + $0x10] sm:$0xff]
      %v424 = vld [vmem:[#allocation14 + $0x18] sm:$0xff]
      %v425 = vld [vmem:[#allocation14 + $0x20] sm:$0xff]
      %v426 = vld [vmem:[#allocation14 + $0x28] sm:$0xff]
      %v427 = vld [vmem:[#allocation14 + $0x30] sm:$0xff]
      %v428 = vld [vmem:[#allocation14 + $0x38] sm:$0xff]
      %v429 = vld [vmem:[#allocation14 + $0x40] sm:$0xff]
      %v430 = vld [vmem:[#allocation14 + $0x48] sm:$0xff]
      %v431 = vld [vmem:[#allocation14 + $0x50] sm:$0xff]
      %v432 = vld [vmem:[#allocation14 + $0x58] sm:$0xff]
      %v433 = vld [vmem:[#allocation14 + $0x60] sm:$0xff]
      %v434 = vld [vmem:[#allocation14 + $0x68] sm:$0xff]
      %v435 = vld [vmem:[#allocation14 + $0x70] sm:$0xff]
      %v436 = vld [vmem:[#allocation14 + $0x78] sm:$0xff]
      %437 = vmatpush.msra.mxu0 %v436
      %438 = vmatpush.msra.mxu0 %v435
      %439 = vmatpush.msra.mxu0 %v434
      %440 = vmatpush.msra.mxu0 %v433
      %441 = vmatpush.msra.mxu0 %v432
      %442 = vmatpush.msra.mxu0 %v431
      %443 = vmatpush.msra.mxu0 %v430
      %444 = vmatpush.msra.mxu0 %v429
      %445 = vmatpush.msra.mxu0 %v428
      %446 = vmatpush.msra.mxu0 %v427
      %447 = vmatpush.msra.mxu0 %v426
      %448 = vmatpush.msra.mxu0 %v425
      %449 = vmatpush.msra.mxu0 %v424
      %450 = vmatpush.msra.mxu0 %v423
      %451 = vmatpush.msra.mxu0 %v422
      %452 = vmatpush.msra.mxu0 %v421
      %453 = vmatmul.f32.gmra.mxu0 %v405
      %v454 = vpop.f32.mrf.mxu0
      %v455 = vadd.f32 0.0, %v454
      %456 = vmatmul.f32.gmra.mxu0 %v406
      %v457 = vpop.f32.mrf.mxu0
      %v458 = vadd.f32 0.0, %v457
      %459 = vmatmul.f32.gmra.mxu0 %v407
      %v460 = vpop.f32.mrf.mxu0
      %v461 = vadd.f32 0.0, %v460
      %462 = vmatmul.f32.gmra.mxu0 %v408
      %v463 = vpop.f32.mrf.mxu0
      %v464 = vadd.f32 0.0, %v463
      %465 = vmatmul.f32.gmra.mxu0 %v409
      %v466 = vpop.f32.mrf.mxu0
      %v467 = vadd.f32 0.0, %v466
      %468 = vmatmul.f32.gmra.mxu0 %v410
      %v469 = vpop.f32.mrf.mxu0
      %v470 = vadd.f32 0.0, %v469
      %471 = vmatmul.f32.gmra.mxu0 %v411
      %v472 = vpop.f32.mrf.mxu0
      %v473 = vadd.f32 0.0, %v472
      %474 = vmatmul.f32.gmra.mxu0 %v412
      %v475 = vpop.f32.mrf.mxu0
      %v476 = vadd.f32 0.0, %v475
      %477 = vmatmul.f32.gmra.mxu0 %v413
      %v478 = vpop.f32.mrf.mxu0
      %v479 = vadd.f32 0.0, %v478
      %480 = vmatmul.f32.gmra.mxu0 %v414
      %v481 = vpop.f32.mrf.mxu0
      %v482 = vadd.f32 0.0, %v481
      %483 = vmatmul.f32.gmra.mxu0 %v415
      %v484 = vpop.f32.mrf.mxu0
      %v485 = vadd.f32 0.0, %v484
      %486 = vmatmul.f32.gmra.mxu0 %v416
      %v487 = vpop.f32.mrf.mxu0
      %v488 = vadd.f32 0.0, %v487
      %489 = vmatmul.f32.gmra.mxu0 %v417
      %v490 = vpop.f32.mrf.mxu0
      %v491 = vadd.f32 0.0, %v490
      %492 = vmatmul.f32.gmra.mxu0 %v418
      %v493 = vpop.f32.mrf.mxu0
      %v494 = vadd.f32 0.0, %v493
      %495 = vmatmul.f32.gmra.mxu0 %v419
      %v496 = vpop.f32.mrf.mxu0
      %v497 = vadd.f32 0.0, %v496
      %498 = vmatmul.f32.gmra.mxu0 %v420
      %v499 = vpop.f32.mrf.mxu0
      %v500 = vadd.f32 0.0, %v499
      %501 = vdwg.mxu0
      %502 = vmatpush.msra.mxu0 %v404
      %503 = vmatpush.msra.mxu0 %v403
      %504 = vmatpush.msra.mxu0 %v402
      %505 = vmatpush.msra.mxu0 %v401
      %506 = vmatpush.msra.mxu0 %v400
      %507 = vmatpush.msra.mxu0 %v399
      %508 = vmatpush.msra.mxu0 %v398
      %509 = vmatpush.msra.mxu0 %v397
      %510 = vmatpush.msra.mxu0 %v396
      %511 = vmatpush.msra.mxu0 %v395
      %512 = vmatpush.msra.mxu0 %v394
      %513 = vmatpush.msra.mxu0 %v393
      %514 = vmatpush.msra.mxu0 %v392
      %515 = vmatpush.msra.mxu0 %v391
      %516 = vmatpush.msra.mxu0 %v390
      %517 = vmatpush.msra.mxu0 %v389
      %518 = vmatmul.f32.gmra.mxu0 %v373
      %v519 = vpop.f32.mrf.mxu0
      %v520 = vadd.f32 %v455, %v519
      %521 = vmatmul.f32.gmra.mxu0 %v374
      %v522 = vpop.f32.mrf.mxu0
      %v523 = vadd.f32 %v458, %v522
      %524 = vmatmul.f32.gmra.mxu0 %v375
      %v525 = vpop.f32.mrf.mxu0
      %v526 = vadd.f32 %v461, %v525
      %527 = vmatmul.f32.gmra.mxu0 %v376
      %v528 = vpop.f32.mrf.mxu0
      %v529 = vadd.f32 %v464, %v528
      %530 = vmatmul.f32.gmra.mxu0 %v377
      %v531 = vpop.f32.mrf.mxu0
      %v532 = vadd.f32 %v467, %v531
      %533 = vmatmul.f32.gmra.mxu0 %v378
      %v534 = vpop.f32.mrf.mxu0
      %v535 = vadd.f32 %v470, %v534
      %536 = vmatmul.f32.gmra.mxu0 %v379
      %v537 = vpop.f32.mrf.mxu0
      %v538 = vadd.f32 %v473, %v537
      %539 = vmatmul.f32.gmra.mxu0 %v380
      %v540 = vpop.f32.mrf.mxu0
      %v541 = vadd.f32 %v476, %v540
      %542 = vmatmul.f32.gmra.mxu0 %v381
      %v543 = vpop.f32.mrf.mxu0
      %v544 = vadd.f32 %v479, %v543
      %545 = vmatmul.f32.gmra.mxu0 %v382
      %v546 = vpop.f32.mrf.mxu0
      %v547 = vadd.f32 %v482, %v546
      %548 = vmatmul.f32.gmra.mxu0 %v383
      %v549 = vpop.f32.mrf.mxu0
      %v550 = vadd.f32 %v485, %v549
      %551 = vmatmul.f32.gmra.mxu0 %v384
      %v552 = vpop.f32.mrf.mxu0
      %v553 = vadd.f32 %v488, %v552
      %554 = vmatmul.f32.gmra.mxu0 %v385
      %v555 = vpop.f32.mrf.mxu0
      %v556 = vadd.f32 %v491, %v555
      %557 = vmatmul.f32.gmra.mxu0 %v386
      %v558 = vpop.f32.mrf.mxu0
      %v559 = vadd.f32 %v494, %v558
      %560 = vmatmul.f32.gmra.mxu0 %v387
      %v561 = vpop.f32.mrf.mxu0
      %v562 = vadd.f32 %v497, %v561
      %563 = vmatmul.f32.gmra.mxu0 %v388
      %v564 = vpop.f32.mrf.mxu0
      %v565 = vadd.f32 %v500, %v564
      %566 = vdwg.mxu0
      %v567 = vld [vmem:[%s7] sm:$0x1]
      %v569 = vperm.slane %v567, 0
      %v571 = vadd.f32 %v520, %v569
      %v572 = vadd.f32 %v523, %v569
      %v573 = vadd.f32 %v526, %v569
      %v574 = vadd.f32 %v529, %v569
      %v575 = vadd.f32 %v532, %v569
      %v576 = vadd.f32 %v535, %v569
      %v577 = vadd.f32 %v538, %v569
      %v578 = vadd.f32 %v541, %v569
      %v579 = vadd.f32 %v544, %v569
      %v580 = vadd.f32 %v547, %v569
      %v581 = vadd.f32 %v550, %v569
      %v582 = vadd.f32 %v553, %v569
      %v583 = vadd.f32 %v556, %v569
      %v584 = vadd.f32 %v559, %v569
      %v585 = vadd.f32 %v562, %v569
      %v586 = vadd.f32 %v565, %v569
      %v587 = vmax.f32 %v571, 0.0
      %v588 = vmax.f32 %v572, 0.0
      %v589 = vmax.f32 %v573, 0.0
      %v590 = vmax.f32 %v574, 0.0
      %v591 = vmax.f32 %v575, 0.0
      %v592 = vmax.f32 %v576, 0.0
      %v593 = vmax.f32 %v577, 0.0
      %v594 = vmax.f32 %v578, 0.0
      %v595 = vmax.f32 %v579, 0.0
      %v596 = vmax.f32 %v580, 0.0
      %v597 = vmax.f32 %v581, 0.0
      %v598 = vmax.f32 %v582, 0.0
      %v599 = vmax.f32 %v583, 0.0
      %v600 = vmax.f32 %v584, 0.0
      %v601 = vmax.f32 %v585, 0.0
      %v602 = vmax.f32 %v586, 0.0
      %603 = vst [vmem:[#allocation15] sm:$0xff] %v587
      %604 = vst [vmem:[#allocation15 + $0x8] sm:$0xff] %v588
      %605 = vst [vmem:[#allocation15 + $0x10] sm:$0xff] %v589
      %606 = vst [vmem:[#allocation15 + $0x18] sm:$0xff] %v590
      %607 = vst [vmem:[#allocation15 + $0x20] sm:$0xff] %v591
      %608 = vst [vmem:[#allocation15 + $0x28] sm:$0xff] %v592
      %609 = vst [vmem:[#allocation15 + $0x30] sm:$0xff] %v593
      %610 = vst [vmem:[#allocation15 + $0x38] sm:$0xff] %v594
      %611 = vst [vmem:[#allocation15 + $0x40] sm:$0xff] %v595
      %612 = vst [vmem:[#allocation15 + $0x48] sm:$0xff] %v596
      %613 = vst [vmem:[#allocation15 + $0x50] sm:$0xff] %v597
      %614 = vst [vmem:[#allocation15 + $0x58] sm:$0xff] %v598
      %615 = vst [vmem:[#allocation15 + $0x60] sm:$0xff] %v599
      %616 = vst [vmem:[#allocation15 + $0x68] sm:$0xff] %v600
      %617 = vst [vmem:[#allocation15 + $0x70] sm:$0xff] %v601
      %618 = vst [vmem:[#allocation15 + $0x78] sm:$0xff] %v602
    $region57: #{tpu_custom_call.1} parent=1 // pred_fallthru
      _
    // Predicated region
    $region58: #{tpu_custom_call.1} parent=1 // pred_check
      _
    $region59: #{tpu_custom_call.1} parent=1 // pred_check_branch
      %620 = sbr.rel (0) target = $region61
    $region60: #{tpu_custom_call.1} parent=1 // pred_region
      %622 = vsyncadd [#allocation8], 0
      %s623 = sshll.u32 [#allocation15], 4
      %s624 = int_to_ptr.vmem [resolvable:$true] %s623
      %s625 = sshll.u32 %s8, 4
      %s626 = int_to_ptr.hbm [resolvable:$true] %s625
      %631 = dma.vmem_to_hbm [thread:$0]  %s624, 2048, %s626, [#allocation8], 128, 128, 8
    $region61: #{tpu_custom_call.1} parent=1 // pred_fallthru
      _
    // Predicated region
    $region62: #{tpu_custom_call.1} parent=1 // pred_check
      _
    $region63: #{tpu_custom_call.1} parent=1 // pred_check_branch
      %633 = sbr.rel (0) target = $region65
    $region64: #{tpu_custom_call.1} parent=1 // pred_region
      %635 = dma.done [#allocation8], 2048
    $region65: #{tpu_custom_call.1} parent=1 // pred_fallthru
      _
    %636 = vsyncpa [#allocation7], 1
    %637 = vsyncpa [#allocation10], 1
    %638 = vsyncpa [#allocation13], 1
    %639 = vsyncpa [#allocation8], 1

</llo_original>
